<compile_context>
chip_gen: v5e
topology: v5e:2x2
jax: 0.10.0
libtpu: 0.0.40
codegen_flags: <defaults>
</compile_context>

<pallas_src>
import functools

import jax
import jax.numpy as jnp
from jax.experimental import pallas as pl
from jax.experimental.pallas import tpu as pltpu


def _actor_critic_kernel(x_ref,
                         w1_ref, b1_ref,
                         w2_ref, b2_ref,
                         wh_ref, bh_ref,
                         out_ref,
                         *, action_dim):
    # x: (S, TB) -- features on sublanes, batch on lanes.
    x = x_ref[...]

    def dot(w, a):
        # MXU matmul, f32 accumulation regardless of operand dtype.
        return jnp.dot(w, a, preferred_element_type=jnp.float32)

    # shared MLP (all activations lane-dense: (64, TB))
    h1 = jnp.tanh(dot(w1_ref[...], x) + b1_ref[...])
    h1 = h1.astype(w2_ref.dtype)                      # no-op in f32, cast for bf16
    h2 = jnp.tanh(dot(w2_ref[...], h1) + b2_ref[...])
    h2 = h2.astype(wh_ref.dtype)

    # fused actor+critic head: single matmul -> (A+1, TB)
    # sublanes [0, A) = actor logits, sublane A = critic value.
    head = dot(wh_ref[...], h2) + bh_ref[...]

    row = jax.lax.broadcasted_iota(jnp.int32, head.shape, 0)
    is_logit = row < action_dim

    # masked, numerically-stable softmax over the logit sublanes only
    masked = jnp.where(is_logit, head, -jnp.inf)
    m = jnp.max(masked, axis=0, keepdims=True)        # (1, TB)
    e = jnp.where(is_logit, jnp.exp(masked - m), 0.0)
    denom = jnp.sum(e, axis=0, keepdims=True)         # (1, TB), always >= 1
    inv = pl.reciprocal(denom, approx=True)           # EUP vrcp (otherwise-idle slot)
    inv = inv * (2.0 - denom * inv)                   # one Newton step -> ~f32 accuracy
    probs = e * inv

    # single lane-dense store: probs on sublanes [0, A), critic value on sublane A
    out_ref[...] = jnp.where(is_logit, probs, head)


def fuse_params(params, *, compute_dtype=jnp.float32):
    """One-time parameter prep (do this once, not per forward call).

    Transposes weights to (out_features, in_features), fuses the actor and
    critic heads into a single (A+1, 64) matmul, reshapes biases to (out, 1)
    for lane-broadcast adds, and optionally casts matmul operands to bf16
    (v6e / v7x MXU native dtype).  Biases stay f32 (added post-accumulation).
    """
    wh = jnp.concatenate([params["wa"], params["wc"]], axis=1)      # (H, A+1)
    bh = jnp.concatenate([params["ba"], params["bc"]], axis=1)      # (1, A+1)
    return dict(
        w1=params["w1"].T.astype(compute_dtype),                    # (H, S)
        b1=params["b1"].reshape(-1, 1).astype(jnp.float32),         # (H, 1)
        w2=params["w2"].T.astype(compute_dtype),                    # (H, H)
        b2=params["b2"].reshape(-1, 1).astype(jnp.float32),         # (H, 1)
        wh=wh.T.astype(compute_dtype),                              # (A+1, H)
        bh=bh.reshape(-1, 1).astype(jnp.float32),                   # (A+1, 1)
    )


def actor_critic_forward(state, fused, *, block_b=None):
    """state: (B, state_dim) f32.  fused: output of fuse_params.
    Returns (probs (B, A), value (B, 1)), both f32."""
    B, S = state.shape
    AO = fused["wh"].shape[0]
    A = AO - 1

    # ---- batch tile sizing (batch is the 128-lane axis) ----
    if block_b is None:
        max_tb = 8192                              # amortize ~0.35us/step overhead
        n_steps = -(-B // max_tb)
        if B > 256:
            # v7x has 2 TensorCores: give the "parallel" grid axis >= 2 (even) steps.
            n_steps = max(2, n_steps)
            if n_steps % 2:
                n_steps += 1
        block_b = -(-B // n_steps)
    block_b = max(128, ((block_b + 127) // 128) * 128)   # lane-aligned
    b_padded = pl.cdiv(B, block_b) * block_b
    grid = (b_padded // block_b,)

    # transpose to features-on-sublanes / batch-on-lanes, pad batch (lanes)
    x = state.T.astype(fused["w1"].dtype)                 # (S, B)
    if b_padded != B:
        x = jnp.pad(x, ((0, 0), (0, b_padded - B)))

    def resident(arr):
        # full-array block, same tile every grid step -> stays in VMEM
        return pl.BlockSpec(arr.shape, lambda i: (0,) * arr.ndim)

    kernel = functools.partial(_actor_critic_kernel, action_dim=A)

    out = pl.pallas_call(
        kernel,
        out_shape=jax.ShapeDtypeStruct((AO, b_padded), jnp.float32),
        grid_spec=pltpu.PrefetchScalarGridSpec(
            num_scalar_prefetch=0,
            grid=grid,
            in_specs=[
                pl.BlockSpec((S, block_b), lambda i: (0, i)),      # state: batch-tiled
                resident(fused["w1"]), resident(fused["b1"]),
                resident(fused["w2"]), resident(fused["b2"]),
                resident(fused["wh"]), resident(fused["bh"]),
            ],
            out_specs=pl.BlockSpec((AO, block_b), lambda i: (0, i)),
        ),
        compiler_params=pltpu.CompilerParams(
            dimension_semantics=("parallel",),                     # megacore / v7x 2 TCs
            vmem_limit_bytes=32 * 1024 * 1024,                     # safe on v7x's 64 MiB too
        ),
    )(x, fused["w1"], fused["b1"], fused["w2"], fused["b2"],
      fused["wh"], fused["bh"])

    probs = out[:A, :B].T                                          # (B, A)
    value = out[A:, :B].T                                          # (B, 1)
    return probs, value


def init_params(key, state_dim, action_dim, hidden=64):
    """Deterministic synthetic init (uniform, nn.Linear fan-in scale).
    Stored PyTorch-math layout: weights (in, out), biases (1, out)."""
    ks = jax.random.split(key, 8)

    def lin(kw, kb, fan_in, fan_out):
        bound = 1.0 / jnp.sqrt(fan_in)
        w = jax.random.uniform(kw, (fan_in, fan_out), jnp.float32, -bound, bound)
        b = jax.random.uniform(kb, (1, fan_out), jnp.float32, -bound, bound)
        return w, b

    w1, b1 = lin(ks[0], ks[1], state_dim, hidden)
    w2, b2 = lin(ks[2], ks[3], hidden, hidden)
    wa, ba = lin(ks[4], ks[5], hidden, action_dim)
    wc, bc = lin(ks[6], ks[7], hidden, 1)
    return dict(w1=w1, b1=b1, w2=w2, b2=b2, wa=wa, ba=ba, wc=wc, bc=bc)


def reference_forward(state, p):
    """Pure-JAX reference for correctness check (matches the PyTorch module)."""
    h1 = jnp.tanh(state @ p["w1"] + p["b1"])
    h2 = jnp.tanh(h1 @ p["w2"] + p["b2"])
    logits = h2 @ p["wa"] + p["ba"]
    probs = jax.nn.softmax(logits, axis=-1)
    value = h2 @ p["wc"] + p["bc"]
    return probs, value


if __name__ == "__main__":
    key = jax.random.PRNGKey(0)
    k_state, k_params = jax.random.split(key)

    B, STATE_DIM, ACTION_DIM = 8, 32, 4
    state = jax.random.normal(k_state, (B, STATE_DIM), jnp.float32)
    params = init_params(k_params, STATE_DIM, ACTION_DIM)

    # one-time parameter fusion (transpose + actor/critic concat), f32 for 1e-5 check;
    # on v6e/v7x use fuse_params(params, compute_dtype=jnp.bfloat16) and relax tolerance.
    fused = fuse_params(params)

    fwd = jax.jit(actor_critic_forward)
    probs, value = fwd(state, fused)
    jax.block_until_ready((probs, value))

    ref_probs, ref_value = reference_forward(state, params)
    assert probs.shape == (B, ACTION_DIM) and value.shape == (B, 1)
    assert jnp.allclose(probs, ref_probs, atol=1e-5, rtol=1e-5)
    assert jnp.allclose(value, ref_value, atol=1e-5, rtol=1e-5)
    assert jnp.allclose(jnp.sum(probs, axis=-1), 1.0, atol=1e-5)

    print("KERNEL_OK")
</pallas_src>

<mosaic_0001>
module attributes {stable_mosaic.version = 11 : i64} {
  func.func @_actor_critic_kernel(%arg0: i32, %arg1: memref<32x128xf32, #tpu.memory_space<vmem>>, %arg2: memref<64x32xf32, #tpu.memory_space<vmem>>, %arg3: memref<64x1xf32, #tpu.memory_space<vmem>>, %arg4: memref<64x64xf32, #tpu.memory_space<vmem>>, %arg5: memref<64x1xf32, #tpu.memory_space<vmem>>, %arg6: memref<5x64xf32, #tpu.memory_space<vmem>>, %arg7: memref<5x1xf32, #tpu.memory_space<vmem>>, %arg8: memref<5x128xf32, #tpu.memory_space<vmem>>) attributes {dimension_semantics = [#tpu.dimension_semantics<parallel>], iteration_bounds = array<i64: 1>, scalar_prefetch = 0 : i64, scratch_operands = 0 : i64, tpu.core_type = #tpu.core_type<tc>, window_params = [{transform_indices = @transform_0, window_bounds = array<i64: 32, 128>}, {pipeline_mode = #tpu.pipeline_mode<synchronous>, transform_indices = @transform_1, window_bounds = array<i64: 64, 32>}, {pipeline_mode = #tpu.pipeline_mode<synchronous>, transform_indices = @transform_2, window_bounds = array<i64: 64, 1>}, {pipeline_mode = #tpu.pipeline_mode<synchronous>, transform_indices = @transform_3, window_bounds = array<i64: 64, 64>}, {pipeline_mode = #tpu.pipeline_mode<synchronous>, transform_indices = @transform_4, window_bounds = array<i64: 64, 1>}, {pipeline_mode = #tpu.pipeline_mode<synchronous>, transform_indices = @transform_5, window_bounds = array<i64: 5, 64>}, {pipeline_mode = #tpu.pipeline_mode<synchronous>, transform_indices = @transform_6, window_bounds = array<i64: 5, 1>}, {transform_indices = @transform_7, window_bounds = array<i64: 5, 128>}]} {
    %c0 = arith.constant 0 : index
    %c0_0 = arith.constant 0 : index
    %0 = vector.load %arg1[%c0, %c0_0] : memref<32x128xf32, #tpu.memory_space<vmem>>, vector<32x128xf32>
    %c0_1 = arith.constant 0 : index
    %c0_2 = arith.constant 0 : index
    %1 = vector.load %arg2[%c0_1, %c0_2] : memref<64x32xf32, #tpu.memory_space<vmem>>, vector<64x32xf32>
    %cst = arith.constant dense<0.000000e+00> : vector<64x128xf32>
    %2 = tpu.matmul %1, %0, %cst {dimension_numbers = #tpu.dot_dimension_numbers<[1], [0], [0], [1], [0, 0, 1, 1], [], []>} : vector<64x32xf32>, vector<32x128xf32>, vector<64x128xf32> -> vector<64x128xf32>
    %c0_3 = arith.constant 0 : index
    %c0_4 = arith.constant 0 : index
    %3 = vector.load %arg3[%c0_3, %c0_4] : memref<64x1xf32, #tpu.memory_space<vmem>>, vector<64x1xf32>
    %4 = vector.broadcast %3 : vector<64x1xf32> to vector<64x128xf32>
    %5 = arith.addf %2, %4 : vector<64x128xf32>
    %6 = math.tanh %5 : vector<64x128xf32>
    %c0_5 = arith.constant 0 : index
    %c0_6 = arith.constant 0 : index
    %7 = vector.load %arg4[%c0_5, %c0_6] : memref<64x64xf32, #tpu.memory_space<vmem>>, vector<64x64xf32>
    %cst_7 = arith.constant dense<0.000000e+00> : vector<64x128xf32>
    %8 = tpu.matmul %7, %6, %cst_7 {dimension_numbers = #tpu.dot_dimension_numbers<[1], [0], [0], [1], [0, 0, 1, 1], [], []>} : vector<64x64xf32>, vector<64x128xf32>, vector<64x128xf32> -> vector<64x128xf32>
    %c0_8 = arith.constant 0 : index
    %c0_9 = arith.constant 0 : index
    %9 = vector.load %arg5[%c0_8, %c0_9] : memref<64x1xf32, #tpu.memory_space<vmem>>, vector<64x1xf32>
    %10 = vector.broadcast %9 : vector<64x1xf32> to vector<64x128xf32>
    %11 = arith.addf %8, %10 : vector<64x128xf32>
    %12 = math.tanh %11 : vector<64x128xf32>
    %c0_10 = arith.constant 0 : index
    %c0_11 = arith.constant 0 : index
    %13 = vector.load %arg6[%c0_10, %c0_11] : memref<5x64xf32, #tpu.memory_space<vmem>>, vector<5x64xf32>
    %cst_12 = arith.constant dense<0.000000e+00> : vector<5x128xf32>
    %14 = tpu.matmul %13, %12, %cst_12 {dimension_numbers = #tpu.dot_dimension_numbers<[1], [0], [0], [1], [0, 0, 1, 1], [], []>} : vector<5x64xf32>, vector<64x128xf32>, vector<5x128xf32> -> vector<5x128xf32>
    %c0_13 = arith.constant 0 : index
    %c0_14 = arith.constant 0 : index
    %15 = vector.load %arg7[%c0_13, %c0_14] : memref<5x1xf32, #tpu.memory_space<vmem>>, vector<5x1xf32>
    %16 = vector.broadcast %15 : vector<5x1xf32> to vector<5x128xf32>
    %17 = arith.addf %14, %16 : vector<5x128xf32>
    %18 = tpu.iota {dimensions = array<i32: 0>} : vector<5x128xi32>
    %c4_i32 = arith.constant 4 : i32
    %19 = vector.broadcast %c4_i32 : i32 to vector<5x128xi32>
    %20 = arith.cmpi slt, %18, %19 : vector<5x128xi32>
    %cst_15 = arith.constant 0xFF800000 : f32
    %21 = vector.broadcast %cst_15 : f32 to vector<5x128xf32>
    %22 = arith.select %20, %17, %21 : vector<5x128xi1>, vector<5x128xf32>
    %cst_16 = arith.constant dense<0xFF800000> : vector<128xf32>
    %23 = vector.multi_reduction <maximumf>, %22, %cst_16 [0] : vector<5x128xf32> to vector<128xf32>
    %24 = vector.shape_cast %23 : vector<128xf32> to vector<1x128xf32>
    %25 = vector.broadcast %24 : vector<1x128xf32> to vector<5x128xf32>
    %26 = arith.subf %22, %25 : vector<5x128xf32>
    %27 = math.exp %26 : vector<5x128xf32>
    %cst_17 = arith.constant 0.000000e+00 : f32
    %28 = vector.broadcast %cst_17 : f32 to vector<5x128xf32>
    %29 = arith.select %20, %27, %28 : vector<5x128xi1>, vector<5x128xf32>
    %cst_18 = arith.constant dense<0.000000e+00> : vector<128xf32>
    %30 = vector.multi_reduction <add>, %29, %cst_18 [0] : vector<5x128xf32> to vector<128xf32>
    %31 = vector.shape_cast %30 : vector<128xf32> to vector<1x128xf32>
    %32 = tpu.reciprocal %31 {approx = true} : vector<1x128xf32> -> vector<1x128xf32>
    %33 = arith.mulf %31, %32 : vector<1x128xf32>
    %cst_19 = arith.constant 2.000000e+00 : f32
    %34 = vector.broadcast %cst_19 : f32 to vector<1x128xf32>
    %35 = arith.subf %34, %33 : vector<1x128xf32>
    %36 = arith.mulf %32, %35 : vector<1x128xf32>
    %37 = vector.broadcast %36 : vector<1x128xf32> to vector<5x128xf32>
    %38 = arith.mulf %29, %37 : vector<5x128xf32>
    %39 = arith.select %20, %38, %17 : vector<5x128xi1>, vector<5x128xf32>
    %c0_20 = arith.constant 0 : index
    %c0_21 = arith.constant 0 : index
    %40 = vector.load %arg8[%c0_20, %c0_21] : memref<5x128xf32, #tpu.memory_space<vmem>>, vector<5x128xf32>
    tpu.vector_store %arg8[%c0_20, %c0_21], %39 {strides = array<i32>} : memref<5x128xf32, #tpu.memory_space<vmem>>, vector<5x128xf32>,
    return
  }
  func.func @transform_0(%arg0: i32) -> (i32, i32) {
    %c0_i32 = arith.constant 0 : i32
    %c0_i32_0 = arith.constant 0 : i32
    return %c0_i32, %arg0 : i32, i32
  }
  func.func @transform_1(%arg0: i32) -> (i32, i32) {
    %c0_i32 = arith.constant 0 : i32
    %c0_i32_0 = arith.constant 0 : i32
    %c0_i32_1 = arith.constant 0 : i32
    return %c0_i32, %c0_i32_0 : i32, i32
  }
  func.func @transform_2(%arg0: i32) -> (i32, i32) {
    %c0_i32 = arith.constant 0 : i32
    %c0_i32_0 = arith.constant 0 : i32
    %c0_i32_1 = arith.constant 0 : i32
    return %c0_i32, %c0_i32_0 : i32, i32
  }
  func.func @transform_3(%arg0: i32) -> (i32, i32) {
    %c0_i32 = arith.constant 0 : i32
    %c0_i32_0 = arith.constant 0 : i32
    %c0_i32_1 = arith.constant 0 : i32
    return %c0_i32, %c0_i32_0 : i32, i32
  }
  func.func @transform_4(%arg0: i32) -> (i32, i32) {
    %c0_i32 = arith.constant 0 : i32
    %c0_i32_0 = arith.constant 0 : i32
    %c0_i32_1 = arith.constant 0 : i32
    return %c0_i32, %c0_i32_0 : i32, i32
  }
  func.func @transform_5(%arg0: i32) -> (i32, i32) {
    %c0_i32 = arith.constant 0 : i32
    %c0_i32_0 = arith.constant 0 : i32
    %c0_i32_1 = arith.constant 0 : i32
    return %c0_i32, %c0_i32_0 : i32, i32
  }
  func.func @transform_6(%arg0: i32) -> (i32, i32) {
    %c0_i32 = arith.constant 0 : i32
    %c0_i32_0 = arith.constant 0 : i32
    %c0_i32_1 = arith.constant 0 : i32
    return %c0_i32, %c0_i32_0 : i32, i32
  }
  func.func @transform_7(%arg0: i32) -> (i32, i32) {
    %c0_i32 = arith.constant 0 : i32
    %c0_i32_0 = arith.constant 0 : i32
    return %c0_i32, %arg0 : i32, i32
  }
}

</mosaic_0001>

<llo_original>
// kernel: actor_critic_forward.1
$region0: #{actor_critic_forward.1}
  #allocation0 [shape = 'u32[]', space=smem, size = 0x4, offset = 0x4, fixed_abs, tag = 'smem constant byte address 0x4 - core index']
  #allocation1 [shape = 'u32[72,128]{1,0:T(1,128)}', space=vmem, size = 0x9000, scoped, tag = 'internal scratch']
  %s0 = inlined_call_operand.vmem [shape: f32[32,128], index: 0, kind: input, shape index: {}]
  %s1 = inlined_call_operand.vmem [shape: f32[64,32], index: 1, kind: input, shape index: {}]
  %s2 = inlined_call_operand.vmem [shape: f32[64,1], index: 2, kind: input, shape index: {}]
  %s3 = inlined_call_operand.vmem [shape: f32[64,64], index: 3, kind: input, shape index: {}]
  %s4 = inlined_call_operand.vmem [shape: f32[64,1], index: 4, kind: input, shape index: {}]
  %s5 = inlined_call_operand.vmem [shape: f32[5,64], index: 5, kind: input, shape index: {}]
  %s6 = inlined_call_operand.vmem [shape: f32[5,1], index: 6, kind: input, shape index: {}]
  %s7 = inlined_call_operand.vmem [shape: f32[5,128], index: 7, kind: output, shape index: {}]
  %s8 = sld [smem:[#allocation0]]
  $region38: #{actor_critic_forward.1} parent=0
    _
  %s10 = ssub.s32 1, %s8
  %s11 = scalar_select 0, %s10, %s8
  // Predicated region
  $region2: #{actor_critic_forward.1} parent=0 // pred_check
    _
  $region3: #{actor_critic_forward.1} parent=0 // pred_check_branch
    %13 = sbr.rel (0) target = $region5
  $region4: #{actor_critic_forward.1} parent=0 // pred_region
    _
  $region5: #{actor_critic_forward.1} parent=0 // pred_fallthru
    _
  // Predicated region
  $region6: #{actor_critic_forward.1} parent=0 // pred_check
    _
  $region7: #{actor_critic_forward.1} parent=0 // pred_check_branch
    %15 = sbr.rel (0) target = $region9
  $region8: #{actor_critic_forward.1} parent=0 // pred_region
    _
  $region9: #{actor_critic_forward.1} parent=0 // pred_fallthru
    _
  // Predicated region
  $region10: #{actor_critic_forward.1} parent=0 // pred_check
    _
  $region11: #{actor_critic_forward.1} parent=0 // pred_check_branch
    %17 = sbr.rel (0) target = $region13
  $region12: #{actor_critic_forward.1} parent=0 // pred_region
    _
  $region13: #{actor_critic_forward.1} parent=0 // pred_fallthru
    _
  // Predicated region
  $region14: #{actor_critic_forward.1} parent=0 // pred_check
    _
  $region15: #{actor_critic_forward.1} parent=0 // pred_check_branch
    %19 = sbr.rel (0) target = $region17
  $region16: #{actor_critic_forward.1} parent=0 // pred_region
    _
  $region17: #{actor_critic_forward.1} parent=0 // pred_fallthru
    _
  // Predicated region
  $region18: #{actor_critic_forward.1} parent=0 // pred_check
    _
  $region19: #{actor_critic_forward.1} parent=0 // pred_check_branch
    %21 = sbr.rel (0) target = $region21
  $region20: #{actor_critic_forward.1} parent=0 // pred_region
    _
  $region21: #{actor_critic_forward.1} parent=0 // pred_fallthru
    _
  // Predicated region
  $region22: #{actor_critic_forward.1} parent=0 // pred_check
    _
  $region23: #{actor_critic_forward.1} parent=0 // pred_check_branch
    %23 = sbr.rel (0) target = $region25
  $region24: #{actor_critic_forward.1} parent=0 // pred_region
    _
  $region25: #{actor_critic_forward.1} parent=0 // pred_fallthru
    _
  // Predicated region
  $region26: #{actor_critic_forward.1} parent=0 // pred_check
    _
  $region27: #{actor_critic_forward.1} parent=0 // pred_check_branch
    %25 = sbr.rel (0) target = $region29
  $region28: #{actor_critic_forward.1} parent=0 // pred_region
    _
  $region29: #{actor_critic_forward.1} parent=0 // pred_fallthru
    _
  %v26 = vld [vmem:[%s0] sm:$0xff]
  %v27 = vld [vmem:[%s0 + $0x8] sm:$0xff]
  %v28 = vld [vmem:[%s0 + $0x10] sm:$0xff]
  %v29 = vld [vmem:[%s0 + $0x18] sm:$0xff]
  %v30 = vld [vmem:[%s1] sm:$0xff]
  %v31 = vld [vmem:[%s1 + $0x8] sm:$0xff]
  %v32 = vld [vmem:[%s1 + $0x10] sm:$0xff]
  %v33 = vld [vmem:[%s1 + $0x18] sm:$0xff]
  %v34 = vld [vmem:[%s1 + $0x20] sm:$0xff]
  %v35 = vld [vmem:[%s1 + $0x28] sm:$0xff]
  %v36 = vld [vmem:[%s1 + $0x30] sm:$0xff]
  %v37 = vld [vmem:[%s1 + $0x38] sm:$0xff]
  %v38 = vld [vmem:[%s2] sm:$0xff]
  %v39 = vld [vmem:[%s2 + $0x8] sm:$0xff]
  %v40 = vld [vmem:[%s2 + $0x10] sm:$0xff]
  %v41 = vld [vmem:[%s2 + $0x18] sm:$0xff]
  %v42 = vld [vmem:[%s2 + $0x20] sm:$0xff]
  %v43 = vld [vmem:[%s2 + $0x28] sm:$0xff]
  %v44 = vld [vmem:[%s2 + $0x30] sm:$0xff]
  %v45 = vld [vmem:[%s2 + $0x38] sm:$0xff]
  %47 = vset.pattern.permute.xlu0 0
  %48 = vperm.xlu0 %47, %v38
  %v49 = vpop.permute.xlu0 %48
  %52 = vset.pattern.permute.xlu0 0
  %53 = vperm.xlu0 %52, %v39
  %v54 = vpop.permute.xlu0 %53
  %57 = vset.pattern.permute.xlu0 0
  %58 = vperm.xlu0 %57, %v40
  %v59 = vpop.permute.xlu0 %58
  %62 = vset.pattern.permute.xlu0 0
  %63 = vperm.xlu0 %62, %v41
  %v64 = vpop.permute.xlu0 %63
  %67 = vset.pattern.permute.xlu0 0
  %68 = vperm.xlu0 %67, %v42
  %v69 = vpop.permute.xlu0 %68
  %72 = vset.pattern.permute.xlu0 0
  %73 = vperm.xlu0 %72, %v43
  %v74 = vpop.permute.xlu0 %73
  %77 = vset.pattern.permute.xlu0 0
  %78 = vperm.xlu0 %77, %v44
  %v79 = vpop.permute.xlu0 %78
  %82 = vset.pattern.permute.xlu0 0
  %83 = vperm.xlu0 %82, %v45
  %v84 = vpop.permute.xlu0 %83
  %vm86 = vcmask 261120
  %v88 = vsel %vm86, %v30, 0
  %v91 = vsel %vm86, %v31, 0
  %v94 = vsel %vm86, %v32, 0
  %v97 = vsel %vm86, %v33, 0
  %v100 = vsel %vm86, %v34, 0
  %v103 = vsel %vm86, %v35, 0
  %v106 = vsel %vm86, %v36, 0
  %v109 = vsel %vm86, %v37, 0
  %111 = vmatpush.msra.mxu0 0.0
  %112 = vmatpush.msra.mxu0 0.0
  %113 = vmatpush.msra.mxu0 0.0
  %114 = vmatpush.msra.mxu0 0.0
  %115 = vmatpush.msra.mxu0 0.0
  %116 = vmatpush.msra.mxu0 0.0
  %117 = vmatpush.msra.mxu0 0.0
  %118 = vmatpush.msra.mxu0 0.0
  %119 = vmatpush.msra.mxu0 0.0
  %120 = vmatpush.msra.mxu0 0.0
  %121 = vmatpush.msra.mxu0 0.0
  %122 = vmatpush.msra.mxu0 0.0
  %123 = vmatpush.msra.mxu0 %v29
  %124 = vmatpush.msra.mxu0 %v28
  %125 = vmatpush.msra.mxu0 %v27
  %126 = vmatpush.msra.mxu0 %v26
  %127 = vmatmul.f32.gmra.mxu0 %v88
  %v128 = vpop.f32.mrf.mxu0
  %v129 = vadd.f32 %v49, %v128
  %130 = vmatmul.f32.gmra.mxu0 %v91
  %v131 = vpop.f32.mrf.mxu0
  %v132 = vadd.f32 %v54, %v131
  %133 = vmatmul.f32.gmra.mxu0 %v94
  %v134 = vpop.f32.mrf.mxu0
  %v135 = vadd.f32 %v59, %v134
  %136 = vmatmul.f32.gmra.mxu0 %v97
  %v137 = vpop.f32.mrf.mxu0
  %v138 = vadd.f32 %v64, %v137
  %139 = vmatmul.f32.gmra.mxu0 %v100
  %v140 = vpop.f32.mrf.mxu0
  %v141 = vadd.f32 %v69, %v140
  %142 = vmatmul.f32.gmra.mxu0 %v103
  %v143 = vpop.f32.mrf.mxu0
  %v144 = vadd.f32 %v74, %v143
  %145 = vmatmul.f32.gmra.mxu0 %v106
  %v146 = vpop.f32.mrf.mxu0
  %v147 = vadd.f32 %v79, %v146
  %148 = vmatmul.f32.gmra.mxu0 %v109
  %v149 = vpop.f32.mrf.mxu0
  %v150 = vadd.f32 %v84, %v149
  %151 = vdwg.mxu0
  %v152 = vtanh.pop %v129
  %v153 = vtanh.pop %v132
  %v154 = vtanh.pop %v135
  %v155 = vtanh.pop %v138
  %v156 = vtanh.pop %v141
  %v157 = vtanh.pop %v144
  %v158 = vtanh.pop %v147
  %v159 = vtanh.pop %v150
  %v160 = vld [vmem:[%s3] sm:$0xff]
  %v161 = vld [vmem:[%s3 + $0x8] sm:$0xff]
  %v162 = vld [vmem:[%s3 + $0x10] sm:$0xff]
  %v163 = vld [vmem:[%s3 + $0x18] sm:$0xff]
  %v164 = vld [vmem:[%s3 + $0x20] sm:$0xff]
  %v165 = vld [vmem:[%s3 + $0x28] sm:$0xff]
  %v166 = vld [vmem:[%s3 + $0x30] sm:$0xff]
  %v167 = vld [vmem:[%s3 + $0x38] sm:$0xff]
  %v168 = vld [vmem:[%s4] sm:$0xff]
  %v169 = vld [vmem:[%s4 + $0x8] sm:$0xff]
  %v170 = vld [vmem:[%s4 + $0x10] sm:$0xff]
  %v171 = vld [vmem:[%s4 + $0x18] sm:$0xff]
  %v172 = vld [vmem:[%s4 + $0x20] sm:$0xff]
  %v173 = vld [vmem:[%s4 + $0x28] sm:$0xff]
  %v174 = vld [vmem:[%s4 + $0x30] sm:$0xff]
  %v175 = vld [vmem:[%s4 + $0x38] sm:$0xff]
  %177 = vset.pattern.permute.xlu0 0
  %178 = vperm.xlu0 %177, %v168
  %v179 = vpop.permute.xlu0 %178
  %182 = vset.pattern.permute.xlu0 0
  %183 = vperm.xlu0 %182, %v169
  %v184 = vpop.permute.xlu0 %183
  %187 = vset.pattern.permute.xlu0 0
  %188 = vperm.xlu0 %187, %v170
  %v189 = vpop.permute.xlu0 %188
  %192 = vset.pattern.permute.xlu0 0
  %193 = vperm.xlu0 %192, %v171
  %v194 = vpop.permute.xlu0 %193
  %197 = vset.pattern.permute.xlu0 0
  %198 = vperm.xlu0 %197, %v172
  %v199 = vpop.permute.xlu0 %198
  %202 = vset.pattern.permute.xlu0 0
  %203 = vperm.xlu0 %202, %v173
  %v204 = vpop.permute.xlu0 %203
  %207 = vset.pattern.permute.xlu0 0
  %208 = vperm.xlu0 %207, %v174
  %v209 = vpop.permute.xlu0 %208
  %212 = vset.pattern.permute.xlu0 0
  %213 = vperm.xlu0 %212, %v175
  %v214 = vpop.permute.xlu0 %213
  %vm216 = vcmask 523264
  %v218 = vsel %vm216, %v160, 0
  %v221 = vsel %vm216, %v161, 0
  %v224 = vsel %vm216, %v162, 0
  %v227 = vsel %vm216, %v163, 0
  %v230 = vsel %vm216, %v164, 0
  %v233 = vsel %vm216, %v165, 0
  %v236 = vsel %vm216, %v166, 0
  %v239 = vsel %vm216, %v167, 0
  %241 = vmatpush.msra.mxu0 0.0
  %242 = vmatpush.msra.mxu0 0.0
  %243 = vmatpush.msra.mxu0 0.0
  %244 = vmatpush.msra.mxu0 0.0
  %245 = vmatpush.msra.mxu0 0.0
  %246 = vmatpush.msra.mxu0 0.0
  %247 = vmatpush.msra.mxu0 0.0
  %248 = vmatpush.msra.mxu0 0.0
  %249 = vmatpush.msra.mxu0 %v159
  %250 = vmatpush.msra.mxu0 %v158
  %251 = vmatpush.msra.mxu0 %v157
  %252 = vmatpush.msra.mxu0 %v156
  %253 = vmatpush.msra.mxu0 %v155
  %254 = vmatpush.msra.mxu0 %v154
  %255 = vmatpush.msra.mxu0 %v153
  %256 = vmatpush.msra.mxu0 %v152
  %257 = vmatmul.f32.gmra.mxu0 %v218
  %v258 = vpop.f32.mrf.mxu0
  %v259 = vadd.f32 %v179, %v258
  %260 = vmatmul.f32.gmra.mxu0 %v221
  %v261 = vpop.f32.mrf.mxu0
  %v262 = vadd.f32 %v184, %v261
  %263 = vmatmul.f32.gmra.mxu0 %v224
  %v264 = vpop.f32.mrf.mxu0
  %v265 = vadd.f32 %v189, %v264
  %266 = vmatmul.f32.gmra.mxu0 %v227
  %v267 = vpop.f32.mrf.mxu0
  %v268 = vadd.f32 %v194, %v267
  %269 = vmatmul.f32.gmra.mxu0 %v230
  %v270 = vpop.f32.mrf.mxu0
  %v271 = vadd.f32 %v199, %v270
  %272 = vmatmul.f32.gmra.mxu0 %v233
  %v273 = vpop.f32.mrf.mxu0
  %v274 = vadd.f32 %v204, %v273
  %275 = vmatmul.f32.gmra.mxu0 %v236
  %v276 = vpop.f32.mrf.mxu0
  %v277 = vadd.f32 %v209, %v276
  %278 = vmatmul.f32.gmra.mxu0 %v239
  %v279 = vpop.f32.mrf.mxu0
  %v280 = vadd.f32 %v214, %v279
  %281 = vdwg.mxu0
  %v282 = vtanh.pop %v259
  %v283 = vtanh.pop %v262
  %v284 = vtanh.pop %v265
  %v285 = vtanh.pop %v268
  %v286 = vtanh.pop %v271
  %v287 = vtanh.pop %v274
  %v288 = vtanh.pop %v277
  %v289 = vtanh.pop %v280
  %v290 = vld [vmem:[%s5] sm:$0x1f]
  %v291 = vld [vmem:[%s6] sm:$0x1f]
  %293 = vset.pattern.permute.xlu0 0
  %294 = vperm.xlu0 %293, %v291
  %v295 = vpop.permute.xlu0 %294
  %v298 = vsel %vm216, %v290, 0
  %300 = vmatpush.msra.mxu0 0.0
  %301 = vmatpush.msra.mxu0 0.0
  %302 = vmatpush.msra.mxu0 0.0
  %303 = vmatpush.msra.mxu0 0.0
  %304 = vmatpush.msra.mxu0 0.0
  %305 = vmatpush.msra.mxu0 0.0
  %306 = vmatpush.msra.mxu0 0.0
  %307 = vmatpush.msra.mxu0 0.0
  %308 = vmatpush.msra.mxu0 %v289
  %309 = vmatpush.msra.mxu0 %v288
  %310 = vmatpush.msra.mxu0 %v287
  %311 = vmatpush.msra.mxu0 %v286
  %312 = vmatpush.msra.mxu0 %v285
  %313 = vmatpush.msra.mxu0 %v284
  %314 = vmatpush.msra.mxu0 %v283
  %315 = vmatpush.msra.mxu0 %v282
  %316 = vmatmul.f32.gmra.mxu0 %v298
  %v317 = vpop.f32.mrf.mxu0
  %v318 = vadd.f32 %v295, %v317
  %319 = vdwg.mxu0
  %v320 = vlaneseq
  %v321 = vshrl.u32 %v320, 7
  %vm322 = vcmp.lt.s32.totalorder %v321, 4
  %v323 = vsel %vm322, %v318, -inf
  %vm324 = vcmask 1044480
  %v325 = vsel %vm324, %v323, -inf
  %v326 = vrot.slane %v325, 4
  %v327 = vmax.f32 %v325, %v326
  %v328 = vrot.slane %v327, 2
  %v329 = vmax.f32 %v327, %v328
  %v330 = vrot.slane %v329, 1
  %v331 = vmax.f32 %v329, %v330
  %v332 = vsub.f32 %v323, %v331
  %v333 = vmul.f32 %v332, 1.442695
  %v334 = vpow.pop %v333
  %v335 = vsel %vm322, %v334, 0.0
  %v336 = vsel %vm324, %v335, 0.0
  %v337 = vrot.slane %v336, 4
  %v338 = vadd.f32 %v336, %v337
  %v339 = vrot.slane %v338, 2
  %v340 = vadd.f32 %v338, %v339
  %v341 = vrot.slane %v340, 1
  %v342 = vadd.f32 %v340, %v341
  %v343 = vrcp.pop %v342
  %v344 = vmul.f32 %v342, %v343
  %v345 = vsub.f32 2.0, %v344
  %v346 = vmul.f32 %v343, %v345
  %v347 = vmul.f32 %v335, %v346
  %v348 = vsel %vm322, %v347, %v318
  %349 = vst [vmem:[%s7] sm:$0x1f] %v348
  // Predicated region
  $region30: #{actor_critic_forward.1} parent=0 // pred_check
    _
  $region31: #{actor_critic_forward.1} parent=0 // pred_check_branch
    %351 = sbr.rel (0) target = $region33
  $region32: #{actor_critic_forward.1} parent=0 // pred_region
    _
  $region33: #{actor_critic_forward.1} parent=0 // pred_fallthru
    _
  // Predicated region
  $region34: #{actor_critic_forward.1} parent=0 // pred_check
    _
  $region35: #{actor_critic_forward.1} parent=0 // pred_check_branch
    %353 = sbr.rel (0) target = $region37
  $region36: #{actor_critic_forward.1} parent=0 // pred_region
    _
  $region37: #{actor_critic_forward.1} parent=0 // pred_fallthru
    _

</llo_original>
